<compile_context>
chip_gen: v7x
topology: tpu7x:2x2x1
jax: 0.10.0
libtpu: 0.0.40
codegen_flags: <defaults>
</compile_context>

<pallas_src>
import functools

import jax
import jax.numpy as jnp
from jax.experimental import pallas as pl
from jax.experimental.pallas import tpu as pltpu


def _mlp_embedder_kernel(x_ref, w1_ref, b1_ref, w2_ref, b2_ref, o_ref, h_ref,
                         *, h_chunk, n_h_chunks, reuse_h):
    def compute_h():
        # Layer 1: h = SiLU(x @ W1 + b1), computed in h_chunk-wide column slabs
        # so the f32 intermediate is capped at (tm, h_chunk). Static trip count
        # and static slices -> free ref views, no dynamic-slice lowering risk.
        for c in range(n_h_chunks):
            s = c * h_chunk
            h = jnp.dot(x_ref[...], w1_ref[:, s:s + h_chunk],
                        preferred_element_type=jnp.float32)
            h = h + b1_ref[:, s:s + h_chunk].astype(jnp.float32)
            h = h * jax.nn.sigmoid(h)          # SiLU (sigmoid runs on the EUP)
            h_ref[:, s:s + h_chunk] = h.astype(h_ref.dtype)

    if reuse_h:
        # Multi-row-tile regime: j is the sequential inner ("arbitrary") axis.
        # h is computed once per row tile and reused for every W2 column slab.
        # NOTE: this relies on j staying sequential with i outer; do NOT mark
        # j "parallel" in this mode.
        @pl.when(pl.program_id(1) == 0)
        def _():
            compute_h()
    else:
        # Single row tile (rows <= tm): recompute the cheap layer 1 per j step
        # so both grid axes are independent ("parallel", "parallel") and the
        # second TensorCore can take half of the W2 streaming.
        compute_h()

    # Layer 2 on the current (hidden, tn) W2 column slab. W2 is already in
    # (k, n) layout -> plain MXU matmul, no in-kernel transpose. f32 accumulate.
    o = jnp.dot(h_ref[...], w2_ref[...], preferred_element_type=jnp.float32)
    o_ref[...] = (o + b2_ref[...].astype(jnp.float32)).astype(o_ref.dtype)


def _round_down(v, m):
    return max(m, (v // m) * m)


def _block_spec(shape, index_map, *, buffers=None):
    """BlockSpec with an optional buffer-count hint; degrades gracefully if the
    installed JAX has no pipeline_mode / pl.Buffered support."""
    buffered = getattr(pl, "Buffered", None)
    if buffers is None or buffered is None:
        return pl.BlockSpec(shape, index_map)
    try:
        return pl.BlockSpec(shape, index_map, pipeline_mode=buffered(buffers))
    except TypeError:
        return pl.BlockSpec(shape, index_map)


def mlp_embedder(x, w_in, b_in, w_out, b_out, *, tm=768, tn=512, h_chunk=512,
                 compute_dtype=jnp.bfloat16):
    """Forward pass of MLPEmbedder.

    x: (..., in_dim). w_in: (hidden, in_dim) (PyTorch Linear layout),
    b_in: (hidden,), w_out: (hidden, hidden), b_out: (hidden,).
    Returns (..., hidden) in x.dtype.
    """
    *lead, in_dim = x.shape
    hidden = w_in.shape[0]
    out_dtype = x.dtype
    out_item = jnp.dtype(out_dtype).itemsize
    item = jnp.dtype(compute_dtype).itemsize

    rows = 1
    for d in lead:
        rows *= d
    x2 = x.reshape(rows, in_dim).astype(compute_dtype)

    # One-time HBM relayout: (out, in) -> (in, out) so both in-kernel dots are
    # plain (m,k)x(k,n) contractions (no per-step XLU transpose of W2 slabs).
    w1t = jnp.asarray(w_in, compute_dtype).T            # (in_dim, hidden)
    w2t = jnp.asarray(w_out, compute_dtype).T           # (hidden, hidden), (k, n)
    b1 = b_in.reshape(1, hidden).astype(jnp.float32)
    b2 = b_out.reshape(1, hidden).astype(jnp.float32)

    # Tile sizes, clamped / aligned to the (8, 128) layout constraint.
    tm_eff = rows if rows <= tm else _round_down(tm, 8)
    tn_eff = hidden if hidden <= tn else _round_down(tn, 128)
    hc = h_chunk if hidden % h_chunk == 0 else hidden
    if hc < hidden and hc % 128 != 0:
        hc = hidden
    n_h_chunks = hidden // hc

    num_i = pl.cdiv(rows, tm_eff)
    num_j = pl.cdiv(hidden, tn_eff)
    grid = (num_i, num_j)

    # rows > tm : reuse SiLU(layer1) across W2 column slabs (j sequential).
    # rows <= tm: recompute cheap layer1 per slab so j can be megacore-parallel.
    reuse_h = num_i > 1
    dim_sem = ("parallel", "arbitrary") if reuse_h else ("parallel", "parallel")
    w2_buffers = 3 if (reuse_h and num_j >= 3) else None   # cover the long j==0 step

    # VMEM budget for this tiling (double-buffered unless noted).
    w2_bufs = w2_buffers if w2_buffers is not None else 2
    footprint = (
        2 * tm_eff * in_dim * item            # x row tile
        + in_dim * hidden * item              # W1 (single-buffered)
        + hidden * 4                          # b1 (single-buffered)
        + w2_bufs * hidden * tn_eff * item    # W2 column slab
        + 2 * tn_eff * 4                      # b2 slab
        + 2 * tm_eff * tn_eff * out_item      # output tile
        + tm_eff * hidden * item              # h scratch (SiLU output, bf16)
        + tm_eff * hc * 4                     # layer-1 f32 chunk temporary
        + tm_eff * tn_eff * 4                 # layer-2 f32 accumulator
    )
    vmem_limit = int(min(max(int(footprint * 1.4) + (2 << 20), 32 << 20), 64 << 20))

    # Grid-aware cost hint: W2 is restreamed once per row tile; x/W1 read once.
    cost = pl.CostEstimate(
        flops=int(2 * rows * in_dim * hidden * (1 if reuse_h else num_j)
                  + 2 * rows * hidden * hidden),
        transcendentals=int(rows * hidden * (1 if reuse_h else num_j)),
        bytes_accessed=int(rows * in_dim * item
                           + in_dim * hidden * item
                           + num_i * hidden * hidden * item
                           + hidden * 4 + num_i * hidden * 4
                           + rows * hidden * out_item),
    )

    kernel = functools.partial(_mlp_embedder_kernel,
                               h_chunk=hc, n_h_chunks=n_h_chunks, reuse_h=reuse_h)

    out = pl.pallas_call(
        kernel,
        out_shape=jax.ShapeDtypeStruct((rows, hidden), out_dtype),
        grid_spec=pltpu.PrefetchScalarGridSpec(
            num_scalar_prefetch=0,
            grid=grid,
            in_specs=[
                _block_spec((tm_eff, in_dim), lambda i, j: (i, 0)),             # x row tile
                _block_spec((in_dim, hidden), lambda i, j: (0, 0), buffers=1),  # W1 (constant)
                _block_spec((1, hidden), lambda i, j: (0, 0), buffers=1),       # b1 (constant)
                _block_spec((hidden, tn_eff), lambda i, j: (0, j),
                            buffers=w2_buffers),                                # W2 column slab
                _block_spec((1, tn_eff), lambda i, j: (0, j)),                  # b2 slab
            ],
            out_specs=pl.BlockSpec((tm_eff, tn_eff), lambda i, j: (i, j)),
            scratch_shapes=[pltpu.VMEM((tm_eff, hidden), compute_dtype)],       # SiLU(h)
        ),
        compiler_params=pltpu.CompilerParams(
            dimension_semantics=dim_sem,
            vmem_limit_bytes=vmem_limit),
        cost_estimate=cost,
    )(x2, w1t, b1, w2t, b2)

    # TODO(synk): optional v6e-only variant holding all of W2 resident in VMEM
    # (single-buffered, no j grid axis) and v7x fp8 W2 streaming are not wired in.
    return out.reshape(*lead, hidden)


def mlp_embedder_ref(x, w_in, b_in, w_out, b_out):
    h = jnp.einsum("...i,hi->...h", x, w_in) + b_in
    h = h * jax.nn.sigmoid(h)
    return jnp.einsum("...i,hi->...h", h, w_out) + b_out


if __name__ == "__main__":
    key = jax.random.PRNGKey(0)
    kx, kw1, kb1, kw2, kb2 = jax.random.split(key, 5)

    # --- Test 1: small MLPEmbedder shapes (single row tile -> recompute path).
    batch, seq, in_dim, hidden = 2, 8, 32, 64
    x = jax.random.normal(kx, (batch, seq, in_dim), dtype=jnp.float32)
    # PyTorch Linear weight layout: (out, in).
    w_in = jax.random.normal(kw1, (hidden, in_dim), dtype=jnp.float32) * 0.05
    b_in = jax.random.normal(kb1, (hidden,), dtype=jnp.float32) * 0.05
    w_out = jax.random.normal(kw2, (hidden, hidden), dtype=jnp.float32) * 0.05
    b_out = jax.random.normal(kb2, (hidden,), dtype=jnp.float32) * 0.05

    y = jax.block_until_ready(mlp_embedder(x, w_in, b_in, w_out, b_out))
    y_ref = mlp_embedder_ref(x, w_in, b_in, w_out, b_out)
    assert y.shape == (batch, seq, hidden)
    # bf16 compute with f32 accumulation vs f32 reference -> loosened tolerance.
    assert jnp.allclose(y, y_ref, atol=2e-2, rtol=2e-2), \
        float(jnp.max(jnp.abs(y - y_ref)))

    # --- Test 2: force the multi-row-tile path (h reused across W2 column
    #             slabs, chunked layer-1 epilogue, multiple column slabs).
    batch2, seq2, in_dim2, hidden2 = 2, 16, 64, 256
    kx2, kw12, kb12, kw22, kb22 = jax.random.split(jax.random.PRNGKey(1), 5)
    x2 = jax.random.normal(kx2, (batch2, seq2, in_dim2), dtype=jnp.float32)
    w_in2 = jax.random.normal(kw12, (hidden2, in_dim2), dtype=jnp.float32) * 0.05
    b_in2 = jax.random.normal(kb12, (hidden2,), dtype=jnp.float32) * 0.05
    w_out2 = jax.random.normal(kw22, (hidden2, hidden2), dtype=jnp.float32) * 0.05
    b_out2 = jax.random.normal(kb22, (hidden2,), dtype=jnp.float32) * 0.05

    y2 = jax.block_until_ready(
        mlp_embedder(x2, w_in2, b_in2, w_out2, b_out2, tm=16, tn=128, h_chunk=128))
    y2_ref = mlp_embedder_ref(x2, w_in2, b_in2, w_out2, b_out2)
    assert y2.shape == (batch2, seq2, hidden2)
    assert jnp.allclose(y2, y2_ref, atol=2e-2, rtol=2e-2), \
        float(jnp.max(jnp.abs(y2 - y2_ref)))

    print("KERNEL_OK")
</pallas_src>

<mosaic_0001>
module attributes {stable_mosaic.version = 11 : i64} {
  func.func @_mlp_embedder_kernel(%arg0: i32, %arg1: i32, %arg2: memref<16x32xbf16, #tpu.memory_space<vmem>>, %arg3: memref<32x64xbf16, #tpu.memory_space<vmem>>, %arg4: memref<1x64xf32, #tpu.memory_space<vmem>>, %arg5: memref<64x64xbf16, #tpu.memory_space<vmem>>, %arg6: memref<1x64xf32, #tpu.memory_space<vmem>>, %arg7: memref<16x64xf32, #tpu.memory_space<vmem>>, %arg8: memref<16x64xbf16, #tpu.memory_space<vmem>>) attributes {dimension_semantics = [#tpu.dimension_semantics<parallel>, #tpu.dimension_semantics<parallel>], iteration_bounds = array<i64: 1, 1>, scalar_prefetch = 0 : i64, scratch_operands = 1 : i64, tpu.core_type = #tpu.core_type<tc>, window_params = [{transform_indices = @transform_0, window_bounds = array<i64: 16, 32>}, {pipeline_mode = #tpu.pipeline_mode<synchronous>, transform_indices = @transform_1, window_bounds = array<i64: 32, 64>}, {pipeline_mode = #tpu.pipeline_mode<synchronous>, transform_indices = @transform_2, window_bounds = array<i64: 1, 64>}, {transform_indices = @transform_3, window_bounds = array<i64: 64, 64>}, {transform_indices = @transform_4, window_bounds = array<i64: 1, 64>}, {transform_indices = @transform_5, window_bounds = array<i64: 16, 64>}]} {
    %c0 = arith.constant 0 : index
    %c0_0 = arith.constant 0 : index
    %0 = vector.load %arg2[%c0, %c0_0] : memref<16x32xbf16, #tpu.memory_space<vmem>>, vector<16x32xbf16>
    %c0_1 = arith.constant 0 : index
    %c0_2 = arith.constant 0 : index
    %1 = vector.load %arg3[%c0_1, %c0_2] : memref<32x64xbf16, #tpu.memory_space<vmem>>, vector<32x64xbf16>
    %cst = arith.constant dense<0.000000e+00> : vector<16x64xf32>
    %2 = tpu.matmul %0, %1, %cst {dimension_numbers = #tpu.dot_dimension_numbers<[1], [0], [0], [1], [0, 0, 1, 1], [], []>} : vector<16x32xbf16>, vector<32x64xbf16>, vector<16x64xf32> -> vector<16x64xf32>
    %c0_3 = arith.constant 0 : index
    %c0_4 = arith.constant 0 : index
    %3 = vector.load %arg4[%c0_3, %c0_4] : memref<1x64xf32, #tpu.memory_space<vmem>>, vector<1x64xf32>
    %4 = vector.broadcast %3 : vector<1x64xf32> to vector<16x64xf32>
    %5 = arith.addf %2, %4 : vector<16x64xf32>
    %6 = arith.negf %5 : vector<16x64xf32>
    %7 = math.exp %6 : vector<16x64xf32>
    %cst_5 = arith.constant 1.000000e+00 : f32
    %8 = vector.broadcast %cst_5 : f32 to vector<16x64xf32>
    %9 = arith.addf %8, %7 : vector<16x64xf32>
    %10 = arith.divf %8, %9 : vector<16x64xf32>
    %11 = arith.mulf %5, %10 : vector<16x64xf32>
    %12 = arith.truncf %11 : vector<16x64xf32> to vector<16x64xbf16>
    %c0_6 = arith.constant 0 : index
    %c0_7 = arith.constant 0 : index
    %13 = vector.load %arg8[%c0_6, %c0_7] : memref<16x64xbf16, #tpu.memory_space<vmem>>, vector<16x64xbf16>
    tpu.vector_store %arg8[%c0_6, %c0_7], %12 {strides = array<i32>} : memref<16x64xbf16, #tpu.memory_space<vmem>>, vector<16x64xbf16>,
    %c0_8 = arith.constant 0 : index
    %c0_9 = arith.constant 0 : index
    %14 = vector.load %arg8[%c0_8, %c0_9] : memref<16x64xbf16, #tpu.memory_space<vmem>>, vector<16x64xbf16>
    %c0_10 = arith.constant 0 : index
    %c0_11 = arith.constant 0 : index
    %15 = vector.load %arg5[%c0_10, %c0_11] : memref<64x64xbf16, #tpu.memory_space<vmem>>, vector<64x64xbf16>
    %cst_12 = arith.constant dense<0.000000e+00> : vector<16x64xf32>
    %16 = tpu.matmul %14, %15, %cst_12 {dimension_numbers = #tpu.dot_dimension_numbers<[1], [0], [0], [1], [0, 0, 1, 1], [], []>} : vector<16x64xbf16>, vector<64x64xbf16>, vector<16x64xf32> -> vector<16x64xf32>
    %c0_13 = arith.constant 0 : index
    %c0_14 = arith.constant 0 : index
    %17 = vector.load %arg6[%c0_13, %c0_14] : memref<1x64xf32, #tpu.memory_space<vmem>>, vector<1x64xf32>
    %18 = vector.broadcast %17 : vector<1x64xf32> to vector<16x64xf32>
    %19 = arith.addf %16, %18 : vector<16x64xf32>
    %c0_15 = arith.constant 0 : index
    %c0_16 = arith.constant 0 : index
    %20 = vector.load %arg7[%c0_15, %c0_16] : memref<16x64xf32, #tpu.memory_space<vmem>>, vector<16x64xf32>
    tpu.vector_store %arg7[%c0_15, %c0_16], %19 {strides = array<i32>} : memref<16x64xf32, #tpu.memory_space<vmem>>, vector<16x64xf32>,
    return
  }
  func.func @transform_0(%arg0: i32, %arg1: i32) -> (i32, i32) {
    %c0_i32 = arith.constant 0 : i32
    %c0_i32_0 = arith.constant 0 : i32
    return %arg0, %c0_i32 : i32, i32
  }
  func.func @transform_1(%arg0: i32, %arg1: i32) -> (i32, i32) {
    %c0_i32 = arith.constant 0 : i32
    %c0_i32_0 = arith.constant 0 : i32
    %c0_i32_1 = arith.constant 0 : i32
    return %c0_i32, %c0_i32_0 : i32, i32
  }
  func.func @transform_2(%arg0: i32, %arg1: i32) -> (i32, i32) {
    %c0_i32 = arith.constant 0 : i32
    %c0_i32_0 = arith.constant 0 : i32
    %c0_i32_1 = arith.constant 0 : i32
    return %c0_i32, %c0_i32_0 : i32, i32
  }
  func.func @transform_3(%arg0: i32, %arg1: i32) -> (i32, i32) {
    %c0_i32 = arith.constant 0 : i32
    %c0_i32_0 = arith.constant 0 : i32
    return %c0_i32, %arg1 : i32, i32
  }
  func.func @transform_4(%arg0: i32, %arg1: i32) -> (i32, i32) {
    %c0_i32 = arith.constant 0 : i32
    %c0_i32_0 = arith.constant 0 : i32
    return %c0_i32, %arg1 : i32, i32
  }
  func.func @transform_5(%arg0: i32, %arg1: i32) -> (i32, i32) {
    %c0_i32 = arith.constant 0 : i32
    return %arg0, %arg1 : i32, i32
  }
}

</mosaic_0001>

<llo_original>
// kernel: tpu_custom_call.1
$region0: #{tpu_custom_call.1}
  #allocation0 [shape = 'u32[]', space=smem, size = 0x4, offset = 0x4, fixed_abs, tag = 'smem constant byte address 0x4 - core index']
  #allocation1 [shape = 'u32[144,128]{1,0:T(1,128)}', space=vmem, size = 0x12000, scoped, tag = 'internal scratch']
  #allocation2 [shape = 'bf16[16,64]{1,0:T(16,128)(2,1)}', space=vmem, size = 0x1000, scoped, tag = 'scratch operand']
  %s0 = inlined_call_operand.hbm [shape: bf16[16,32], index: 0, kind: input, shape index: {}]
  %s1 = inlined_call_operand.hbm [shape: bf16[32,64], index: 1, kind: input, shape index: {}]
  %s2 = inlined_call_operand.vmem [shape: f32[1,64], index: 2, kind: input, shape index: {}]
  %s3 = inlined_call_operand.hbm [shape: bf16[64,64], index: 3, kind: input, shape index: {}]
  %s4 = inlined_call_operand.vmem [shape: f32[1,64], index: 4, kind: input, shape index: {}]
  %s5 = inlined_call_operand.hbm [shape: f32[16,64], index: 5, kind: output, shape index: {}]
  %s6 = sld [smem:[#allocation0]]
  $region42: #{tpu_custom_call.1} parent=0
    _
  %s8 = ssub.s32 1, %s6
  %s9 = scalar_select 0, %s8, %s6
  $region1: #{tpu_custom_call.1} parent=0
    #allocation3 [shape = 'u8[4096]{0}', space=vmem, size = 0x1000, scoped, tag = 'input window, operand 0, single buffered']
    #allocation4 [shape = 's32[1]{0}', space=sflag, size = 0x4, scoped, tag = 'scoped memory for tpu_custom_call.1']
    #allocation5 [shape = 's32[1]{0}', space=sflag, size = 0x4, scoped, tag = 'scoped memory for tpu_custom_call.1']
    #allocation6 [shape = 'u8[8192]{0}', space=vmem, size = 0x2000, scoped, tag = 'input window, operand 1, single buffered']
    #allocation7 [shape = 's32[1]{0}', space=sflag, size = 0x4, scoped, tag = 'scoped memory for tpu_custom_call.1']
    #allocation8 [shape = 'u8[16384]{0}', space=vmem, size = 0x4000, scoped, tag = 'input window, operand 3, single buffered']
    #allocation9 [shape = 'u8[8192]{0}', space=vmem, size = 0x2000, scoped, tag = 'output window, operand 0, single buffered']
    %10 = vsyncpa [#allocation4], 0
    %11 = vsyncpa [#allocation7], 0
    %12 = vsyncpa [#allocation5], 0
    // Predicated region
    $region2: #{tpu_custom_call.1} parent=1 // pred_check
      _
    $region3: #{tpu_custom_call.1} parent=1 // pred_check_branch
      %14 = sbr.rel (0) target = $region5
    $region4: #{tpu_custom_call.1} parent=1 // pred_region
      %s16 = ssub.s32 128, 128
      %17 = vsyncadd [#allocation4], %s16
      %s18 = sshll.u32 [#allocation3], 4
      %s19 = int_to_ptr.vmem [resolvable:$true] %s18
      %24 = dma.hbm_to_vmem [thread:$0]  %s0, 128, %s19, [#allocation4], 64, 64, 4
    $region5: #{tpu_custom_call.1} parent=1 // pred_fallthru
      _
    // Predicated region
    $region6: #{tpu_custom_call.1} parent=1 // pred_check
      _
    $region7: #{tpu_custom_call.1} parent=1 // pred_check_branch
      %26 = sbr.rel (0) target = $region9
    $region8: #{tpu_custom_call.1} parent=1 // pred_region
      %s28 = ssub.s32 256, 256
      %29 = vsyncadd [#allocation7], %s28
      %s30 = sshll.u32 [#allocation6], 4
      %s31 = int_to_ptr.vmem [resolvable:$true] %s30
      %36 = dma.hbm_to_vmem [thread:$0]  %s1, 256, %s31, [#allocation7], 64, 64, 4
    $region9: #{tpu_custom_call.1} parent=1 // pred_fallthru
      _
    // Predicated region
    $region10: #{tpu_custom_call.1} parent=1 // pred_check
      _
    $region11: #{tpu_custom_call.1} parent=1 // pred_check_branch
      %38 = sbr.rel (0) target = $region13
    $region12: #{tpu_custom_call.1} parent=1 // pred_region
      _
    $region13: #{tpu_custom_call.1} parent=1 // pred_fallthru
      _
    // Predicated region
    $region14: #{tpu_custom_call.1} parent=1 // pred_check
      _
    $region15: #{tpu_custom_call.1} parent=1 // pred_check_branch
      %40 = sbr.rel (0) target = $region17
    $region16: #{tpu_custom_call.1} parent=1 // pred_region
      %s42 = ssub.s32 512, 512
      %43 = vsyncadd [#allocation7], %s42
      %s44 = sshll.u32 [#allocation8], 4
      %s45 = int_to_ptr.vmem [resolvable:$true] %s44
      %50 = dma.hbm_to_vmem [thread:$0]  %s3, 512, %s45, [#allocation7], 64, 64, 4
    $region17: #{tpu_custom_call.1} parent=1 // pred_fallthru
      _
    // Predicated region
    $region18: #{tpu_custom_call.1} parent=1 // pred_check
      _
    $region19: #{tpu_custom_call.1} parent=1 // pred_check_branch
      %52 = sbr.rel (0) target = $region21
    $region20: #{tpu_custom_call.1} parent=1 // pred_region
      _
    $region21: #{tpu_custom_call.1} parent=1 // pred_fallthru
      _
    // Predicated region
    $region22: #{tpu_custom_call.1} parent=1 // pred_check
      _
    $region23: #{tpu_custom_call.1} parent=1 // pred_check_branch
      %54 = sbr.rel (0) target = $region25
    $region24: #{tpu_custom_call.1} parent=1 // pred_region
      %55 = dma.done [#allocation4], 128
    $region25: #{tpu_custom_call.1} parent=1 // pred_fallthru
      _
    // Predicated region
    $region26: #{tpu_custom_call.1} parent=1 // pred_check
      _
    $region27: #{tpu_custom_call.1} parent=1 // pred_check_branch
      %57 = sbr.rel (0) target = $region29
    $region28: #{tpu_custom_call.1} parent=1 // pred_region
      %58 = dma.done [#allocation7], 256
    $region29: #{tpu_custom_call.1} parent=1 // pred_fallthru
      _
    // Predicated region
    $region30: #{tpu_custom_call.1} parent=1 // pred_check
      _
    $region31: #{tpu_custom_call.1} parent=1 // pred_check_branch
      %60 = sbr.rel (0) target = $region33
    $region32: #{tpu_custom_call.1} parent=1 // pred_region
      %61 = dma.done [#allocation7], 512
    $region33: #{tpu_custom_call.1} parent=1 // pred_fallthru
      _
    %v63 = vld [vmem:[#allocation3] sm:$0xf]
    %v64 = vld [vmem:[#allocation3 + $0x4] sm:$0xf]
    %v65 = vld [vmem:[#allocation6] sm:$0xf]
    %v66 = vld [vmem:[#allocation6 + $0x4] sm:$0xf]
    %v67 = vld [vmem:[#allocation6 + $0x8] sm:$0xf]
    %v68 = vld [vmem:[#allocation6 + $0xc] sm:$0xf]
    %v69 = vld [vmem:[%s2] sm:$0x1]
    %v71 = vlaneseq
    %v72 = vshrl.u32 %v71, 7
    %v73 = vsub.s32 0, %v72
    %v74 = vrot.slane %v69, %v73
    %v78 = vunpack.c.l.b16 %v63
    %v79 = vunpack.c.l.b16 %v64
    %v80 = vpack.c.b16 %v79, %v78
    %v85 = vunpack.c.l.b16 %v65
    %v86 = vunpack.c.l.b16 %v66
    %v87 = vunpack.c.l.b16 %v67
    %v88 = vunpack.c.l.b16 %v68
    %v89 = vpack.c.b16 %v86, %v85
    %v90 = vpack.c.b16 %v88, %v87
    %vm93 = vcmask 261120
    %v95 = vsel %vm93, %v80, 0
    %97 = vmatprep.subr.bf16.mxu0 0
    %98 = vmatpush1.bf16.msra.mxu0 %v89
    %99 = vmatprep.subr.bf16.mxu0 0
    %100 = vmatpush1.bf16.msra.mxu0 %v90
    %101 = vmatprep.subr.bf16.mxu0 0
    %102 = vmatpush1.bf16.msra.mxu0 0
    %103 = vmatprep.subr.bf16.mxu0 0
    %104 = vmatpush1.bf16.msra.mxu0 0
    %105 = vmatprep.subr.bf16.mxu0 0
    %106 = vmatpush1.bf16.msra.mxu0 0
    %107 = vmatprep.subr.bf16.mxu0 0
    %108 = vmatpush1.bf16.msra.mxu0 0
    %109 = vmatprep.subr.bf16.mxu0 0
    %110 = vmatpush1.bf16.msra.mxu0 0
    %111 = vmatprep.subr.bf16.mxu0 0
    %112 = vmatpush1.bf16.msra.mxu0 0
    %113 = vmatprep.subr.bf16.mxu0 0
    %114 = vmatpush1.bf16.msra.mxu0 0
    %115 = vmatprep.subr.bf16.mxu0 0
    %116 = vmatpush1.bf16.msra.mxu0 0
    %117 = vmatprep.subr.bf16.mxu0 0
    %118 = vmatpush1.bf16.msra.mxu0 0
    %119 = vmatprep.subr.bf16.mxu0 0
    %120 = vmatpush1.bf16.msra.mxu0 0
    %121 = vmatprep.subr.bf16.mxu0 0
    %122 = vmatpush1.bf16.msra.mxu0 0
    %123 = vmatprep.subr.bf16.mxu0 0
    %124 = vmatpush1.bf16.msra.mxu0 0
    %125 = vmatprep.subr.bf16.mxu0 0
    %126 = vmatpush1.bf16.msra.mxu0 0
    %127 = vmatprep.subr.bf16.mxu0 0
    %128 = vmatpush1.bf16.msra.mxu0 0
    %129 = vmatprep.mubr.bf16.mxu0 0
    %130 = vmatmul.mubr.bf16.gmra.mrb[0].mxu0 %v95
    %v131 = vpop.f32.mrb[0].mxu0
    %v132 = vadd.f32 %v74, %v131
    %v133 = vpop.f32.mrb[0].mxu0
    %v134 = vpop.f32.mrb[0].mxu0
    %v135 = vadd.f32 %v74, %v134
    %v136 = vpop.f32.mrb[0].mxu0
    %137 = vdwg.mxu0
    %v138 = vxor.u32 %v132, 2147483648
    %v139 = vxor.u32 %v135, 2147483648
    %v140 = vmul.f32 %v138, 1.442695
    %v141 = vpow.pop %v140
    %v142 = vmul.f32 %v139, 1.442695
    %v143 = vpow.pop %v142
    %v144 = vadd.f32 %v141, 1.0
    %v145 = vadd.f32 %v143, 1.0
    %v146 = vrcp.pop %v144
    %v147 = vmul.f32 1.0, %v146
    %v148 = vrcp.pop %v145
    %v149 = vmul.f32 1.0, %v148
    %v150 = vmul.f32 %v132, %v147
    %v151 = vmul.f32 %v135, %v149
    %v152 = vpack.c.bf16 %v151, %v150
    %vm153 = vcmask 523264
    %154 = vst.msk [vmem:[#allocation2] sm:$0xff] %vm153, %v152
    %v155 = vld [vmem:[#allocation2] sm:$0xff]
    %v156 = vld [vmem:[#allocation8] sm:$0xf]
    %v157 = vld [vmem:[#allocation8 + $0x4] sm:$0xf]
    %v158 = vld [vmem:[#allocation8 + $0x8] sm:$0xf]
    %v159 = vld [vmem:[#allocation8 + $0xc] sm:$0xf]
    %v160 = vld [vmem:[#allocation8 + $0x10] sm:$0xf]
    %v161 = vld [vmem:[#allocation8 + $0x14] sm:$0xf]
    %v162 = vld [vmem:[#allocation8 + $0x18] sm:$0xf]
    %v163 = vld [vmem:[#allocation8 + $0x1c] sm:$0xf]
    %v164 = vld [vmem:[%s4] sm:$0x1]
    %v166 = vlaneseq
    %v167 = vshrl.u32 %v166, 7
    %v168 = vsub.s32 0, %v167
    %v169 = vrot.slane %v164, %v168
    %v179 = vunpack.c.l.b16 %v156
    %v180 = vunpack.c.l.b16 %v157
    %v181 = vunpack.c.l.b16 %v158
    %v182 = vunpack.c.l.b16 %v159
    %v183 = vunpack.c.l.b16 %v160
    %v184 = vunpack.c.l.b16 %v161
    %v185 = vunpack.c.l.b16 %v162
    %v186 = vunpack.c.l.b16 %v163
    %v187 = vpack.c.b16 %v180, %v179
    %v188 = vpack.c.b16 %v182, %v181
    %v189 = vpack.c.b16 %v184, %v183
    %v190 = vpack.c.b16 %v186, %v185
    %v196 = vsel %vm153, %v155, 0
    %198 = vmatprep.subr.bf16.mxu0 0
    %199 = vmatpush1.bf16.msra.mxu0 %v187
    %200 = vmatprep.subr.bf16.mxu0 0
    %201 = vmatpush1.bf16.msra.mxu0 %v188
    %202 = vmatprep.subr.bf16.mxu0 0
    %203 = vmatpush1.bf16.msra.mxu0 %v189
    %204 = vmatprep.subr.bf16.mxu0 0
    %205 = vmatpush1.bf16.msra.mxu0 %v190
    %206 = vmatprep.subr.bf16.mxu0 0
    %207 = vmatpush1.bf16.msra.mxu0 0
    %208 = vmatprep.subr.bf16.mxu0 0
    %209 = vmatpush1.bf16.msra.mxu0 0
    %210 = vmatprep.subr.bf16.mxu0 0
    %211 = vmatpush1.bf16.msra.mxu0 0
    %212 = vmatprep.subr.bf16.mxu0 0
    %213 = vmatpush1.bf16.msra.mxu0 0
    %214 = vmatprep.subr.bf16.mxu0 0
    %215 = vmatpush1.bf16.msra.mxu0 0
    %216 = vmatprep.subr.bf16.mxu0 0
    %217 = vmatpush1.bf16.msra.mxu0 0
    %218 = vmatprep.subr.bf16.mxu0 0
    %219 = vmatpush1.bf16.msra.mxu0 0
    %220 = vmatprep.subr.bf16.mxu0 0
    %221 = vmatpush1.bf16.msra.mxu0 0
    %222 = vmatprep.subr.bf16.mxu0 0
    %223 = vmatpush1.bf16.msra.mxu0 0
    %224 = vmatprep.subr.bf16.mxu0 0
    %225 = vmatpush1.bf16.msra.mxu0 0
    %226 = vmatprep.subr.bf16.mxu0 0
    %227 = vmatpush1.bf16.msra.mxu0 0
    %228 = vmatprep.subr.bf16.mxu0 0
    %229 = vmatpush1.bf16.msra.mxu0 0
    %230 = vmatprep.mubr.bf16.mxu0 0
    %231 = vmatmul.mubr.bf16.gmra.mrb[0].mxu0 %v196
    %v232 = vpop.f32.mrb[0].mxu0
    %v233 = vadd.f32 %v169, %v232
    %v234 = vpop.f32.mrb[0].mxu0
    %v235 = vpop.f32.mrb[0].mxu0
    %v236 = vadd.f32 %v169, %v235
    %v237 = vpop.f32.mrb[0].mxu0
    %238 = vdwg.mxu0
    %239 = vst.msk [vmem:[#allocation9] sm:$0xff] %vm153, %v233
    %240 = vst.msk [vmem:[#allocation9 + $0x8] sm:$0xff] %vm153, %v236
    // Predicated region
    $region34: #{tpu_custom_call.1} parent=1 // pred_check
      _
    $region35: #{tpu_custom_call.1} parent=1 // pred_check_branch
      %242 = sbr.rel (0) target = $region37
    $region36: #{tpu_custom_call.1} parent=1 // pred_region
      %s244 = ssub.s32 256, 256
      %245 = vsyncadd [#allocation5], %s244
      %s246 = sshll.u32 [#allocation9], 4
      %s247 = int_to_ptr.vmem [resolvable:$true] %s246
      %252 = dma.vmem_to_hbm [thread:$0]  %s247, 256, %s5, [#allocation5], 128, 128, 8
    $region37: #{tpu_custom_call.1} parent=1 // pred_fallthru
      _
    // Predicated region
    $region38: #{tpu_custom_call.1} parent=1 // pred_check
      _
    $region39: #{tpu_custom_call.1} parent=1 // pred_check_branch
      %254 = sbr.rel (0) target = $region41
    $region40: #{tpu_custom_call.1} parent=1 // pred_region
      %255 = dma.done [#allocation5], 256
    $region41: #{tpu_custom_call.1} parent=1 // pred_fallthru
      _
    %256 = vsyncpa [#allocation4], 1
    %257 = vsyncpa [#allocation7], 1
    %258 = vsyncpa [#allocation5], 1

</llo_original>
